<compile_context>
chip_gen: v7x
topology: tpu7x:2x2x1
jax: 0.10.0
libtpu: 0.0.40
codegen_flags: <defaults>
</compile_context>

<pallas_src>
import jax
import jax.numpy as jnp
import numpy as np
from jax.experimental import pallas as pl
from jax.experimental.pallas import tpu as pltpu


# 2048 rows x 128 lanes x 4 B = 1 MiB per tile; (in + out) x 2 pipeline buffers
# = 4 MiB, comfortably under the 32 MiB default scoped-VMEM limit on v7x while
# still large enough to amortize the ~0.35 us per-grid-step overhead.
_TILE_ROWS = 2048


def _copy_kernel(x_ref, o_ref):
    # Identity copy: the only representable "compute" of a no-op forward.
    o_ref[...] = x_ref[...]


def bpg_device_copy(data: jax.Array) -> jax.Array:
    """Debug-only: route `data` through a lane-dense identity copy in VMEM."""
    orig_shape = data.shape
    total = data.size

    if total % 128 == 0:
        # Lane-dense slab: last dim = 128 lanes -> unmasked full-width stores.
        data_2d = data.reshape(total // 128, 128)
    else:
        # Fallback: full-array block (exempt from the (8,128) rule).
        data_2d = data.reshape(-1, orig_shape[-1])
    rows, cols = data_2d.shape

    if cols % 128 == 0 and rows % _TILE_ROWS == 0 and rows > _TILE_ROWS:
        # Large (codec-frame-sized) inputs: tiled copy.  "parallel" lets v7x
        # shard the mem-bound copy across its 2 TensorCores; on v5e/v6e the
        # choice is measured near-neutral.
        out_2d = pl.pallas_call(
            _copy_kernel,
            out_shape=jax.ShapeDtypeStruct((rows, cols), data_2d.dtype),
            grid=(rows // _TILE_ROWS,),
            in_specs=[pl.BlockSpec((_TILE_ROWS, cols), lambda i: (i, 0))],
            out_specs=pl.BlockSpec((_TILE_ROWS, cols), lambda i: (i, 0)),
            input_output_aliases={0: 0},
            compiler_params=pltpu.CompilerParams(
                dimension_semantics=("parallel",)
            ),
        )(data_2d)
    else:
        # Small inputs: single whole-array block in VMEM, no grid machinery,
        # input aliased to output.
        out_2d = pl.pallas_call(
            _copy_kernel,
            out_shape=jax.ShapeDtypeStruct((rows, cols), data_2d.dtype),
            in_specs=[pl.BlockSpec(memory_space=pltpu.MemorySpace.VMEM)],
            out_specs=pl.BlockSpec(memory_space=pltpu.MemorySpace.VMEM),
            input_output_aliases={0: 0},
        )(data_2d)

    return out_2d.reshape(orig_shape)


class BPGCodecPallas:
    """JAX/Pallas counterpart of torchDVC BPG_Codec.

    __init__ takes `args` and allocates no parameters (matching the reference).
    forward(data, param) returns None (matching `pass`) and, by default,
    performs no device work — the identity copy is debug-gated.
    """

    def __init__(self, args=None, exercise_device_copy: bool = False) -> None:
        del args  # reference __init__ stores nothing
        self._exercise_device_copy = exercise_device_copy

    def forward(self, data, param) -> None:
        del param  # reference forward never touches `param`
        if self._exercise_device_copy:
            # Debug path only: optionally prove the data path runs on-device.
            jax.block_until_ready(bpg_device_copy(data))
        return None  # exact reference semantics

    __call__ = forward


if __name__ == "__main__":
    key = jax.random.PRNGKey(0)
    k_data, k_param = jax.random.split(key)

    # Small shapes consistent with an image-codec input: NCHW batch of images
    # plus a per-image quality parameter.
    data = jax.random.normal(k_data, (2, 4, 16, 16), dtype=jnp.float32)
    param = jax.random.randint(k_param, (2,), 20, 40, dtype=jnp.int32)

    # Host snapshot before the aliased kernel call (input is aliased/donated
    # to the output inside the pallas_call).
    data_host = np.asarray(data)

    # Module semantics: forward returns None and does no device work by default.
    codec = BPGCodecPallas(args=None)
    assert codec(data, param) is None

    # Exercise the debug identity-copy kernel exactly once and verify it.
    out = bpg_device_copy(data)
    jax.block_until_ready(out)
    np.testing.assert_array_equal(np.asarray(out), data_host)

    print("KERNEL_OK")
</pallas_src>

<mosaic_0001>
module attributes {stable_mosaic.version = 11 : i64} {
  func.func @_copy_kernel(%arg0: memref<16x128xf32, #tpu.memory_space<vmem>>, %arg1: memref<16x128xf32, #tpu.memory_space<vmem>>) attributes {dimension_semantics = [], scalar_prefetch = 0 : i64, scratch_operands = 0 : i64, tpu.core_type = #tpu.core_type<tc>} {
    %c0 = arith.constant 0 : index
    %c0_0 = arith.constant 0 : index
    %0 = vector.load %arg0[%c0, %c0_0] : memref<16x128xf32, #tpu.memory_space<vmem>>, vector<16x128xf32>
    %c0_1 = arith.constant 0 : index
    %c0_2 = arith.constant 0 : index
    %1 = vector.load %arg1[%c0_1, %c0_2] : memref<16x128xf32, #tpu.memory_space<vmem>>, vector<16x128xf32>
    tpu.vector_store %arg1[%c0_1, %c0_2], %0 {strides = array<i32>} : memref<16x128xf32, #tpu.memory_space<vmem>>, vector<16x128xf32>,
    return
  }
}

</mosaic_0001>

<llo_original>
// kernel: tpu_custom_call.1
$region0: #{tpu_custom_call.1}
  #allocation0 [shape = 'u32[]', space=smem, size = 0x4, offset = 0x4, fixed_abs, tag = 'smem constant byte address 0x4 - core index']
  #allocation1 [shape = 'u32[144,128]{1,0:T(1,128)}', space=vmem, size = 0x12000, scoped, tag = 'internal scratch']
  %s0 = inlined_call_operand.hbm [shape: f32[16,128], index: 0, kind: input, shape index: {}, may-alias: {0,1}]
  %s1 = inlined_call_operand.hbm [shape: f32[16,128], index: 1, kind: output, shape index: {}, may-alias: {0,1}]
  %s2 = sld [smem:[#allocation0]]
  $region18: #{tpu_custom_call.1} parent=0
    _
  %s4 = ssub.s32 1, %s2
  %s5 = scalar_select 0, %s4, %s2
  $region1: #{tpu_custom_call.1} parent=0
    #allocation2 [shape = 'u8[8192]{0}', space=vmem, size = 0x2000, scoped, tag = 'input window, operand 0, single buffered']
    #allocation3 [shape = 's32[1]{0}', space=sflag, size = 0x4, scoped, tag = 'scoped memory for tpu_custom_call.1']
    #allocation4 [shape = 's32[1]{0}', space=sflag, size = 0x4, scoped, tag = 'scoped memory for tpu_custom_call.1']
    #allocation5 [shape = 'u8[8192]{0}', space=vmem, size = 0x2000, scoped, tag = 'output window, operand 0, single buffered']
    %6 = vsyncpa [#allocation3], 0
    %7 = vsyncpa [#allocation4], 0
    // Predicated region
    $region2: #{tpu_custom_call.1} parent=1 // pred_check
      _
    $region3: #{tpu_custom_call.1} parent=1 // pred_check_branch
      %9 = sbr.rel (0) target = $region5
    $region4: #{tpu_custom_call.1} parent=1 // pred_region
      %s11 = ssub.s32 256, 256
      %12 = vsyncadd [#allocation3], %s11
      %s13 = sshll.u32 [#allocation2], 4
      %s14 = int_to_ptr.vmem [resolvable:$true] %s13
      %19 = dma.hbm_to_vmem [thread:$0]  %s0, 256, %s14, [#allocation3], 128, 128, 8
    $region5: #{tpu_custom_call.1} parent=1 // pred_fallthru
      _
    // Predicated region
    $region6: #{tpu_custom_call.1} parent=1 // pred_check
      _
    $region7: #{tpu_custom_call.1} parent=1 // pred_check_branch
      %21 = sbr.rel (0) target = $region9
    $region8: #{tpu_custom_call.1} parent=1 // pred_region
      %22 = dma.done [#allocation3], 256
    $region9: #{tpu_custom_call.1} parent=1 // pred_fallthru
      _
    %v23 = vld [vmem:[#allocation2] sm:$0xff]
    %v24 = vld [vmem:[#allocation2 + $0x8] sm:$0xff]
    %25 = vst [vmem:[#allocation5] sm:$0xff] %v23
    %26 = vst [vmem:[#allocation5 + $0x8] sm:$0xff] %v24
    // Predicated region
    $region10: #{tpu_custom_call.1} parent=1 // pred_check
      _
    $region11: #{tpu_custom_call.1} parent=1 // pred_check_branch
      %28 = sbr.rel (0) target = $region13
    $region12: #{tpu_custom_call.1} parent=1 // pred_region
      %s30 = ssub.s32 256, 256
      %31 = vsyncadd [#allocation4], %s30
      %s32 = sshll.u32 [#allocation5], 4
      %s33 = int_to_ptr.vmem [resolvable:$true] %s32
      %38 = dma.vmem_to_hbm [thread:$0]  %s33, 256, %s1, [#allocation4], 128, 128, 8
    $region13: #{tpu_custom_call.1} parent=1 // pred_fallthru
      _
    // Predicated region
    $region14: #{tpu_custom_call.1} parent=1 // pred_check
      _
    $region15: #{tpu_custom_call.1} parent=1 // pred_check_branch
      %40 = sbr.rel (0) target = $region17
    $region16: #{tpu_custom_call.1} parent=1 // pred_region
      %41 = dma.done [#allocation4], 256
    $region17: #{tpu_custom_call.1} parent=1 // pred_fallthru
      _
    %42 = vsyncpa [#allocation3], 1
    %43 = vsyncpa [#allocation4], 1

</llo_original>
